<compile_context>
chip_gen: v7x
topology: tpu7x:2x2x1
jax: 0.10.0
libtpu: 0.0.40
codegen_flags: <defaults>
</compile_context>

<pallas_src>
import math

import jax
import jax.numpy as jnp
from jax.experimental import pallas as pl
from jax.experimental.pallas import tpu as pltpu


def _round_up(x, m):
    return ((x + m - 1) // m) * m


def functional_estimator_kernel(x_ref, w1_ref, b1_ref, w2_ref, b2_ref, o_ref):
    # Layer 1: (TB, F) @ (F, Hp) on the MXU with f32 accumulation; bias + ReLU
    # on the VPU.  Padded hidden lanes are exactly zero (zero W1 cols, zero b1).
    h = jnp.dot(x_ref[...], w1_ref[...], preferred_element_type=jnp.float32)
    h = jnp.maximum(h + b1_ref[...], 0.0)
    # Layer 2 (num_output == 1): VPU multiply by the (1, Hp) weight row, then
    # an XLU cross-lane reduction instead of an N=1 MXU matmul.
    y = jnp.sum(h * w2_ref[...], axis=-1, keepdims=True) + b2_ref[...]
    y = jnp.maximum(y, 0.0)
    # Lane-dense store: (TB, 1) -> (1, 1, TB).  The sublane->lane relayout runs
    # on the XLU; the store becomes a full-lane vst instead of a masked column.
    o_ref[...] = y.reshape(o_ref.shape)


def functional_estimator(x, mask, w1, b1, w2_row, b2, *, block_batch=None,
                         use_bf16_inputs=False):
    """x: (B, F); mask: (1, F); w1: (F, H); b1: (1, H); w2_row: (1, H); b2: (1, 1)."""
    B, F = x.shape
    H = w1.shape[1]

    # Fold the constant 0/1 mask into W1 once (exact for a 0/1 mask).
    w1_masked = mask.reshape(F, 1) * w1

    # Zero-pad the hidden dim to a multiple of 128 (exact: ReLU(0*x+0)=0 and
    # padded lanes contribute 0 to the layer-2 sum).
    H_pad = _round_up(H, 128)
    if H_pad != H:
        w1_masked = jnp.pad(w1_masked, ((0, 0), (0, H_pad - H)))
        b1 = jnp.pad(b1, ((0, 0), (0, H_pad - H)))
        w2_row = jnp.pad(w2_row, ((0, 0), (0, H_pad - H)))

    # Optional bf16 inputs: halves the x / w1 DMA bytes on the HBM-bound path
    # (v6e/v7x); accumulation stays f32 via preferred_element_type.
    if use_bf16_inputs:
        x = x.astype(jnp.bfloat16)
        w1_masked = w1_masked.astype(jnp.bfloat16)

    # ---- batch tiling (no jnp.pad of x; tail-block rows are sliced off) ----
    if block_batch is None:
        if B <= 1024:
            # Tiny problems: a single grid step (per-step overhead ~0.35us
            # would otherwise dominate).
            block_batch = _round_up(B, 8)
        else:
            # Multiple steps so v7x's two TensorCores both get work; 512-row
            # tiles sit near the HBM roofline.
            block_batch = 512
    block_batch = max(8, _round_up(block_batch, 8))

    x_item = jnp.dtype(x.dtype).itemsize
    w_item = jnp.dtype(w1_masked.dtype).itemsize

    def vmem_budget(bb):
        return (2 * bb * F * x_item        # double-buffered x tiles
                + 2 * F * H_pad * w_item   # resident masked W1 (assume 2 bufs)
                + 4 * H_pad * 4            # b1 / W2-row buffers
                + 2 * bb * H_pad * 4       # hidden activations + headroom
                + 2 * bb * 4               # output tiles
                + (1 << 20))               # slack

    # Generation-aware cap: stay under 56 MiB so the design also fits v7x's
    # 64 MiB physical VMEM (v5e/v6e have 128 MiB).
    while vmem_budget(block_batch) > (56 << 20) and block_batch > 8:
        block_batch = max(8, _round_up(block_batch // 2, 8))
    # TODO(synk): if F*H_pad alone exceeds the VMEM cap, the hidden dim needs
    # tiling with an accumulator; unnecessary at these shapes.

    num_tiles = pl.cdiv(B, block_batch)
    vmem_limit = int(min(max(vmem_budget(block_batch) * 2, 32 << 20), 64 << 20))

    out = pl.pallas_call(
        functional_estimator_kernel,
        out_shape=jax.ShapeDtypeStruct((num_tiles, 1, block_batch), jnp.float32),
        grid=(num_tiles,),
        in_specs=[
            pl.BlockSpec((block_batch, F), lambda i: (i, 0)),   # x: tiled over batch
            pl.BlockSpec((F, H_pad), lambda i: (0, 0)),         # masked W1, resident
            pl.BlockSpec((1, H_pad), lambda i: (0, 0)),         # b1, resident
            pl.BlockSpec((1, H_pad), lambda i: (0, 0)),         # W2 row, resident
            pl.BlockSpec((1, 1), lambda i: (0, 0)),             # b2, resident
        ],
        out_specs=pl.BlockSpec((1, 1, block_batch), lambda i: (i, 0, 0)),
        compiler_params=pltpu.CompilerParams(
            dimension_semantics=("parallel",),
            vmem_limit_bytes=vmem_limit,
        ),
    )(x, w1_masked, b1, w2_row, b2)

    # (num_tiles, 1, block_batch) -> (num_tiles*block_batch, 1) -> (B, 1)
    return out.reshape(num_tiles * block_batch, 1)[:B]


def init_params(key, num_variables, num_features, target):
    """Deterministic init mirroring nn.Linear's uniform(-1/sqrt(fan_in))."""
    num_hidden = 4 * max(num_variables, num_features)
    num_output = 1

    k1, k2, k3, k4 = jax.random.split(key, 4)

    bound1 = 1.0 / math.sqrt(num_features)
    w1 = jax.random.uniform(k1, (num_features, num_hidden), jnp.float32,
                            minval=-bound1, maxval=bound1)
    b1 = jax.random.uniform(k2, (1, num_hidden), jnp.float32,
                            minval=-bound1, maxval=bound1)

    bound2 = 1.0 / math.sqrt(num_hidden)
    w2_row = jax.random.uniform(k3, (num_output, num_hidden), jnp.float32,
                                minval=-bound2, maxval=bound2)
    b2 = jax.random.uniform(k4, (1, num_output), jnp.float32,
                            minval=-bound2, maxval=bound2)

    # ground_truth = ones(V, V) with zero diagonal; forward uses only row `target`.
    ground_truth = jnp.ones((num_variables, num_variables), jnp.float32)
    ground_truth = ground_truth - jnp.eye(num_variables, dtype=jnp.float32)
    mask = ground_truth[target].reshape(1, num_variables)

    return mask, w1, b1, w2_row, b2


def reference_forward(x, mask, w1, b1, w2_row, b2):
    h = jnp.maximum((x * mask) @ w1 + b1, 0.0)
    return jnp.maximum(h @ w2_row.T + b2, 0.0)


if __name__ == "__main__":
    # num_variables == num_features (required for the original module's
    # mask-broadcast + Linear shapes to be consistent).
    num_variables = 8
    num_features = 8
    target = 2
    batch = 32          # tiny demo -> single grid step, H padded 32 -> 128

    key = jax.random.PRNGKey(0)
    kx, kp = jax.random.split(key)

    x = jax.random.normal(kx, (batch, num_features), jnp.float32)
    mask, w1, b1, w2_row, b2 = init_params(kp, num_variables, num_features, target)

    out = functional_estimator(x, mask, w1, b1, w2_row, b2)
    out = jax.block_until_ready(out)

    ref = reference_forward(x, mask, w1, b1, w2_row, b2)
    assert out.shape == (batch, 1)
    assert jnp.allclose(out, ref, atol=1e-5, rtol=1e-5)

    print("KERNEL_OK")
</pallas_src>

<mosaic_0001>
module attributes {stable_mosaic.version = 11 : i64} {
  func.func @functional_estimator_kernel(%arg0: i32, %arg1: memref<32x8xf32, #tpu.memory_space<vmem>>, %arg2: memref<8x128xf32, #tpu.memory_space<vmem>>, %arg3: memref<1x128xf32, #tpu.memory_space<vmem>>, %arg4: memref<1x128xf32, #tpu.memory_space<vmem>>, %arg5: memref<1x1xf32, #tpu.memory_space<vmem>>, %arg6: memref<1x1x32xf32, #tpu.memory_space<vmem>>) attributes {dimension_semantics = [#tpu.dimension_semantics<parallel>], iteration_bounds = array<i64: 1>, scalar_prefetch = 0 : i64, scratch_operands = 0 : i64, tpu.core_type = #tpu.core_type<tc>, window_params = [{transform_indices = @transform_0, window_bounds = array<i64: 32, 8>}, {pipeline_mode = #tpu.pipeline_mode<synchronous>, transform_indices = @transform_1, window_bounds = array<i64: 8, 128>}, {pipeline_mode = #tpu.pipeline_mode<synchronous>, transform_indices = @transform_2, window_bounds = array<i64: 1, 128>}, {pipeline_mode = #tpu.pipeline_mode<synchronous>, transform_indices = @transform_3, window_bounds = array<i64: 1, 128>}, {pipeline_mode = #tpu.pipeline_mode<synchronous>, transform_indices = @transform_4, window_bounds = array<i64: 1, 1>}, {transform_indices = @transform_5, window_bounds = array<i64: 1, 1, 32>}]} {
    %c0 = arith.constant 0 : index
    %c0_0 = arith.constant 0 : index
    %0 = vector.load %arg1[%c0, %c0_0] : memref<32x8xf32, #tpu.memory_space<vmem>>, vector<32x8xf32>
    %c0_1 = arith.constant 0 : index
    %c0_2 = arith.constant 0 : index
    %1 = vector.load %arg2[%c0_1, %c0_2] : memref<8x128xf32, #tpu.memory_space<vmem>>, vector<8x128xf32>
    %cst = arith.constant dense<0.000000e+00> : vector<32x128xf32>
    %2 = tpu.matmul %0, %1, %cst {dimension_numbers = #tpu.dot_dimension_numbers<[1], [0], [0], [1], [0, 0, 1, 1], [], []>} : vector<32x8xf32>, vector<8x128xf32>, vector<32x128xf32> -> vector<32x128xf32>
    %c0_3 = arith.constant 0 : index
    %c0_4 = arith.constant 0 : index
    %3 = vector.load %arg3[%c0_3, %c0_4] : memref<1x128xf32, #tpu.memory_space<vmem>>, vector<1x128xf32>
    %4 = vector.broadcast %3 : vector<1x128xf32> to vector<32x128xf32>
    %5 = arith.addf %2, %4 : vector<32x128xf32>
    %cst_5 = arith.constant 0.000000e+00 : f32
    %6 = vector.broadcast %cst_5 : f32 to vector<32x128xf32>
    %7 = arith.maximumf %5, %6 : vector<32x128xf32>
    %c0_6 = arith.constant 0 : index
    %c0_7 = arith.constant 0 : index
    %8 = vector.load %arg4[%c0_6, %c0_7] : memref<1x128xf32, #tpu.memory_space<vmem>>, vector<1x128xf32>
    %9 = vector.broadcast %8 : vector<1x128xf32> to vector<32x128xf32>
    %10 = arith.mulf %7, %9 : vector<32x128xf32>
    %cst_8 = arith.constant dense<0.000000e+00> : vector<32xf32>
    %11 = vector.multi_reduction <add>, %10, %cst_8 [1] : vector<32x128xf32> to vector<32xf32>
    %12 = vector.shape_cast %11 : vector<32xf32> to vector<32x1xf32>
    %c0_9 = arith.constant 0 : index
    %c0_10 = arith.constant 0 : index
    %13 = vector.load %arg5[%c0_9, %c0_10] : memref<1x1xf32, #tpu.memory_space<vmem>>, vector<1x1xf32>
    %14 = vector.broadcast %13 : vector<1x1xf32> to vector<32x1xf32>
    %15 = arith.addf %12, %14 : vector<32x1xf32>
    %cst_11 = arith.constant 0.000000e+00 : f32
    %16 = vector.broadcast %cst_11 : f32 to vector<32x1xf32>
    %17 = arith.maximumf %15, %16 : vector<32x1xf32>
    %18 = vector.shape_cast %17 : vector<32x1xf32> to vector<1x1x32xf32>
    %c0_12 = arith.constant 0 : index
    %c0_13 = arith.constant 0 : index
    %c0_14 = arith.constant 0 : index
    %19 = vector.load %arg6[%c0_12, %c0_13, %c0_14] : memref<1x1x32xf32, #tpu.memory_space<vmem>>, vector<1x1x32xf32>
    tpu.vector_store %arg6[%c0_12, %c0_13, %c0_14], %18 {strides = array<i32>} : memref<1x1x32xf32, #tpu.memory_space<vmem>>, vector<1x1x32xf32>,
    return
  }
  func.func @transform_0(%arg0: i32) -> (i32, i32) {
    %c0_i32 = arith.constant 0 : i32
    %c0_i32_0 = arith.constant 0 : i32
    return %arg0, %c0_i32 : i32, i32
  }
  func.func @transform_1(%arg0: i32) -> (i32, i32) {
    %c0_i32 = arith.constant 0 : i32
    %c0_i32_0 = arith.constant 0 : i32
    %c0_i32_1 = arith.constant 0 : i32
    return %c0_i32, %c0_i32_0 : i32, i32
  }
  func.func @transform_2(%arg0: i32) -> (i32, i32) {
    %c0_i32 = arith.constant 0 : i32
    %c0_i32_0 = arith.constant 0 : i32
    %c0_i32_1 = arith.constant 0 : i32
    return %c0_i32, %c0_i32_0 : i32, i32
  }
  func.func @transform_3(%arg0: i32) -> (i32, i32) {
    %c0_i32 = arith.constant 0 : i32
    %c0_i32_0 = arith.constant 0 : i32
    %c0_i32_1 = arith.constant 0 : i32
    return %c0_i32, %c0_i32_0 : i32, i32
  }
  func.func @transform_4(%arg0: i32) -> (i32, i32) {
    %c0_i32 = arith.constant 0 : i32
    %c0_i32_0 = arith.constant 0 : i32
    %c0_i32_1 = arith.constant 0 : i32
    return %c0_i32, %c0_i32_0 : i32, i32
  }
  func.func @transform_5(%arg0: i32) -> (i32, i32, i32) {
    %c0_i32 = arith.constant 0 : i32
    %c0_i32_0 = arith.constant 0 : i32
    %c0_i32_1 = arith.constant 0 : i32
    return %arg0, %c0_i32, %c0_i32_0 : i32, i32, i32
  }
}

</mosaic_0001>

<llo_original>
// kernel: tpu_custom_call.1
$region0: #{tpu_custom_call.1}
  #allocation0 [shape = 'u32[]', space=smem, size = 0x4, offset = 0x4, fixed_abs, tag = 'smem constant byte address 0x4 - core index']
  #allocation1 [shape = 'u32[144,128]{1,0:T(1,128)}', space=vmem, size = 0x12000, scoped, tag = 'internal scratch']
  #allocation2 [shape = 'f32[1,1]{1,0:T(1,128)S(1)}', space=vmem, size = 0x200, scoped, tag = 'scoped memory for tpu_custom_call.1']
  %s0 = inlined_call_operand.vmem [shape: f32[32,8], index: 0, kind: input, shape index: {}]
  %s1 = inlined_call_operand.vmem [shape: f32[8,128], index: 1, kind: input, shape index: {}]
  %s2 = inlined_call_operand.vmem [shape: f32[1,128], index: 2, kind: input, shape index: {}]
  %s3 = inlined_call_operand.vmem [shape: f32[1,128], index: 3, kind: input, shape index: {}]
  %s4 = inlined_call_operand.<no memory space> [shape: f32[1,1], index: 4, kind: input, shape index: {}]
  %s5 = inlined_call_operand.hbm [shape: f32[1,1,32], index: 5, kind: output, shape index: {}]
  %s6 = sld [smem:[#allocation0]]
  $region30: #{tpu_custom_call.1} parent=0
    _
  %s8 = ssub.s32 1, %s6
  %s9 = scalar_select 0, %s8, %s6
  %v10 = vstv %s4
  %11 = vst [vmem:[#allocation2] sm:$0x1] %v10
  $region1: #{tpu_custom_call.1} parent=0
    #allocation3 [shape = 'u8[512]{0}', space=vmem, size = 0x400, scoped, tag = 'output window, operand 0, single buffered']
    #allocation4 [shape = 's32[1]{0}', space=sflag, size = 0x4, scoped, tag = 'scoped memory for tpu_custom_call.1']
    %12 = vsyncpa [#allocation4], 0
    // Predicated region
    $region2: #{tpu_custom_call.1} parent=1 // pred_check
      _
    $region3: #{tpu_custom_call.1} parent=1 // pred_check_branch
      %14 = sbr.rel (0) target = $region5
    $region4: #{tpu_custom_call.1} parent=1 // pred_region
      _
    $region5: #{tpu_custom_call.1} parent=1 // pred_fallthru
      _
    // Predicated region
    $region6: #{tpu_custom_call.1} parent=1 // pred_check
      _
    $region7: #{tpu_custom_call.1} parent=1 // pred_check_branch
      %16 = sbr.rel (0) target = $region9
    $region8: #{tpu_custom_call.1} parent=1 // pred_region
      _
    $region9: #{tpu_custom_call.1} parent=1 // pred_fallthru
      _
    // Predicated region
    $region10: #{tpu_custom_call.1} parent=1 // pred_check
      _
    $region11: #{tpu_custom_call.1} parent=1 // pred_check_branch
      %18 = sbr.rel (0) target = $region13
    $region12: #{tpu_custom_call.1} parent=1 // pred_region
      _
    $region13: #{tpu_custom_call.1} parent=1 // pred_fallthru
      _
    // Predicated region
    $region14: #{tpu_custom_call.1} parent=1 // pred_check
      _
    $region15: #{tpu_custom_call.1} parent=1 // pred_check_branch
      %20 = sbr.rel (0) target = $region17
    $region16: #{tpu_custom_call.1} parent=1 // pred_region
      _
    $region17: #{tpu_custom_call.1} parent=1 // pred_fallthru
      _
    // Predicated region
    $region18: #{tpu_custom_call.1} parent=1 // pred_check
      _
    $region19: #{tpu_custom_call.1} parent=1 // pred_check_branch
      %22 = sbr.rel (0) target = $region21
    $region20: #{tpu_custom_call.1} parent=1 // pred_region
      _
    $region21: #{tpu_custom_call.1} parent=1 // pred_fallthru
      _
    %v23 = vld [vmem:[%s0] sm:$0xff]
    %v24 = vld [vmem:[%s0 + $0x8] sm:$0xff]
    %v25 = vld [vmem:[%s0 + $0x10] sm:$0xff]
    %v26 = vld [vmem:[%s0 + $0x18] sm:$0xff]
    %v27 = vld [vmem:[%s1] sm:$0xff]
    %v28 = vld [vmem:[%s2] sm:$0x1]
    %v30 = vlaneseq
    %v31 = vshrl.u32 %v30, 7
    %v32 = vsub.s32 0, %v31
    %v33 = vrot.slane %v28, %v32
    %vm35 = vcmask 64512
    %v37 = vsel %vm35, %v23, 0
    %v40 = vsel %vm35, %v24, 0
    %v43 = vsel %vm35, %v25, 0
    %v46 = vsel %vm35, %v26, 0
    %48 = vmatprep.subr.mxu0 0.0
    %49 = vmatpush1.msra.mxu0 %v27
    %50 = vmatprep.subr.mxu0 0.0
    %51 = vmatpush1.msra.mxu0 0.0
    %52 = vmatprep.subr.mxu0 0.0
    %53 = vmatpush1.msra.mxu0 0.0
    %54 = vmatprep.subr.mxu0 0.0
    %55 = vmatpush1.msra.mxu0 0.0
    %56 = vmatprep.subr.mxu0 0.0
    %57 = vmatpush1.msra.mxu0 0.0
    %58 = vmatprep.subr.mxu0 0.0
    %59 = vmatpush1.msra.mxu0 0.0
    %60 = vmatprep.subr.mxu0 0.0
    %61 = vmatpush1.msra.mxu0 0.0
    %62 = vmatprep.subr.mxu0 0.0
    %63 = vmatpush1.msra.mxu0 0.0
    %64 = vmatprep.subr.mxu0 0.0
    %65 = vmatpush1.msra.mxu0 0.0
    %66 = vmatprep.subr.mxu0 0.0
    %67 = vmatpush1.msra.mxu0 0.0
    %68 = vmatprep.subr.mxu0 0.0
    %69 = vmatpush1.msra.mxu0 0.0
    %70 = vmatprep.subr.mxu0 0.0
    %71 = vmatpush1.msra.mxu0 0.0
    %72 = vmatprep.subr.mxu0 0.0
    %73 = vmatpush1.msra.mxu0 0.0
    %74 = vmatprep.subr.mxu0 0.0
    %75 = vmatpush1.msra.mxu0 0.0
    %76 = vmatprep.subr.mxu0 0.0
    %77 = vmatpush1.msra.mxu0 0.0
    %78 = vmatprep.subr.mxu0 0.0
    %79 = vmatpush1.msra.mxu0 0.0
    %80 = vmatprep.subr.mxu0 0.0
    %81 = vmatpush1.msra.mxu0 0.0
    %82 = vmatprep.subr.mxu0 0.0
    %83 = vmatpush1.msra.mxu0 0.0
    %84 = vmatprep.subr.mxu0 0.0
    %85 = vmatpush1.msra.mxu0 0.0
    %86 = vmatprep.subr.mxu0 0.0
    %87 = vmatpush1.msra.mxu0 0.0
    %88 = vmatprep.subr.mxu0 0.0
    %89 = vmatpush1.msra.mxu0 0.0
    %90 = vmatprep.subr.mxu0 0.0
    %91 = vmatpush1.msra.mxu0 0.0
    %92 = vmatprep.subr.mxu0 0.0
    %93 = vmatpush1.msra.mxu0 0.0
    %94 = vmatprep.subr.mxu0 0.0
    %95 = vmatpush1.msra.mxu0 0.0
    %96 = vmatprep.subr.mxu0 0.0
    %97 = vmatpush1.msra.mxu0 0.0
    %98 = vmatprep.subr.mxu0 0.0
    %99 = vmatpush1.msra.mxu0 0.0
    %100 = vmatprep.subr.mxu0 0.0
    %101 = vmatpush1.msra.mxu0 0.0
    %102 = vmatprep.subr.mxu0 0.0
    %103 = vmatpush1.msra.mxu0 0.0
    %104 = vmatprep.subr.mxu0 0.0
    %105 = vmatpush1.msra.mxu0 0.0
    %106 = vmatprep.subr.mxu0 0.0
    %107 = vmatpush1.msra.mxu0 0.0
    %108 = vmatprep.subr.mxu0 0.0
    %109 = vmatpush1.msra.mxu0 0.0
    %110 = vmatprep.subr.mxu0 0.0
    %111 = vmatpush1.msra.mxu0 0.0
    %112 = vmatprep.mubr.f32.mxu0 0.0
    %113 = vmatmul.mubr.f32.gmra.mrb[0].mxu0 %v37
    %v114 = vpop.f32.mrb[0].mxu0
    %v115 = vadd.f32 %v33, %v114
    %v116 = vpop.f32.mrb[0].mxu0
    %117 = vmatprep.mubr.f32.mxu0 0.0
    %118 = vmatmul.mubr.f32.gmra.mrb[0].mxu0 %v40
    %v119 = vpop.f32.mrb[0].mxu0
    %v120 = vadd.f32 %v33, %v119
    %v121 = vpop.f32.mrb[0].mxu0
    %122 = vmatprep.mubr.f32.mxu0 0.0
    %123 = vmatmul.mubr.f32.gmra.mrb[0].mxu0 %v43
    %v124 = vpop.f32.mrb[0].mxu0
    %v125 = vadd.f32 %v33, %v124
    %v126 = vpop.f32.mrb[0].mxu0
    %127 = vmatprep.mubr.f32.mxu0 0.0
    %128 = vmatmul.mubr.f32.gmra.mrb[0].mxu0 %v46
    %v129 = vpop.f32.mrb[0].mxu0
    %v130 = vadd.f32 %v33, %v129
    %v131 = vpop.f32.mrb[0].mxu0
    %132 = vdwg.mxu0
    %v133 = vmax.f32 %v115, 0.0
    %v134 = vmax.f32 %v120, 0.0
    %v135 = vmax.f32 %v125, 0.0
    %v136 = vmax.f32 %v130, 0.0
    %v137 = vld [vmem:[%s3] sm:$0x1]
    %v139 = vlaneseq
    %v140 = vshrl.u32 %v139, 7
    %v141 = vsub.s32 0, %v140
    %v142 = vrot.slane %v137, %v141
    %v144 = vmul.f32 %v133, %v142
    %v145 = vmul.f32 %v134, %v142
    %v146 = vmul.f32 %v135, %v142
    %v147 = vmul.f32 %v136, %v142
    %148 = vadd.xlane.f32.xlu0 %v144
    %v149 = vpop.xlane.xlu0 %148
    %150 = vadd.xlane.f32.xlu0 %v145
    %v151 = vpop.xlane.xlu0 %150
    %152 = vadd.xlane.f32.xlu0 %v146
    %v153 = vpop.xlane.xlu0 %152
    %154 = vadd.xlane.f32.xlu0 %v147
    %v155 = vpop.xlane.xlu0 %154
    %v156 = vld [vmem:[#allocation2] sm:$0x1]
    %v158 = vlaneseq
    %v159 = vshrl.u32 %v158, 7
    %v160 = vsub.s32 0, %v159
    %v161 = vrot.slane %v156, %v160
    %v163 = vadd.f32 %v149, %v161
    %v164 = vadd.f32 %v151, %v161
    %v165 = vadd.f32 %v153, %v161
    %v166 = vadd.f32 %v155, %v161
    %v167 = vmax.f32 %v163, 0.0
    %v168 = vmax.f32 %v164, 0.0
    %v169 = vmax.f32 %v165, 0.0
    %v170 = vmax.f32 %v166, 0.0
    %175 = vset.pattern.permute.xlu0 0
    %176 = vperm.xlu0 %175, %v167
    %v177 = vpop.permute.xlu0 %176
    %178 = vset.pattern.permute.xlu0 0
    %179 = vperm.xlu0 %178, %v168
    %v180 = vpop.permute.xlu0 %179
    %181 = vset.pattern.permute.xlu0 0
    %182 = vperm.xlu0 %181, %v169
    %v183 = vpop.permute.xlu0 %182
    %184 = vset.pattern.permute.xlu0 0
    %185 = vperm.xlu0 %184, %v170
    %v186 = vpop.permute.xlu0 %185
    %v187 = vlaneseq
    %v188 = vand.u32 %v187, 127
    %v189 = vlaneseq
    %v190 = vshrl.u32 %v189, 7
    %v191 = vsub.s32 %v188, %v190
    %v192 = vrot.slane %v177, %v191
    %v193 = vadd.s32 %v188, 4294967288
    %v194 = vlaneseq
    %v195 = vshrl.u32 %v194, 7
    %v196 = vsub.s32 %v193, %v195
    %v197 = vrot.slane %v180, %v196
    %vm198 = vcmask 130112
    %v199 = vsel %vm198, %v197, %v192
    %v200 = vadd.s32 %v188, 4294967280
    %v201 = vlaneseq
    %v202 = vshrl.u32 %v201, 7
    %v203 = vsub.s32 %v200, %v202
    %v204 = vrot.slane %v183, %v203
    %vm205 = vcmask 195712
    %v206 = vsel %vm205, %v204, %v199
    %v207 = vadd.s32 %v188, 4294967272
    %v208 = vlaneseq
    %v209 = vshrl.u32 %v208, 7
    %v210 = vsub.s32 %v207, %v209
    %v211 = vrot.slane %v186, %v210
    %vm212 = vcmask 261312
    %v213 = vsel %vm212, %v211, %v206
    %vm215 = vcmask 253952
    %216 = vst.msk [vmem:[#allocation3] sm:$0x1] %vm215, %v213
    // Predicated region
    $region22: #{tpu_custom_call.1} parent=1 // pred_check
      _
    $region23: #{tpu_custom_call.1} parent=1 // pred_check_branch
      %218 = sbr.rel (0) target = $region25
    $region24: #{tpu_custom_call.1} parent=1 // pred_region
      %s220 = ssub.s32 16, 16
      %221 = vsyncadd [#allocation4], %s220
      %s223 = sshll.u32 [#allocation3], 4
      %s224 = int_to_ptr.vmem [resolvable:$true] %s223
      %226 = dma.vmem_to_hbm [thread:$0]  %s224, 16, %s5, [#allocation4]
    $region25: #{tpu_custom_call.1} parent=1 // pred_fallthru
      _
    // Predicated region
    $region26: #{tpu_custom_call.1} parent=1 // pred_check
      _
    $region27: #{tpu_custom_call.1} parent=1 // pred_check_branch
      %228 = sbr.rel (0) target = $region29
    $region28: #{tpu_custom_call.1} parent=1 // pred_region
      %229 = dma.done [#allocation4], 16
    $region29: #{tpu_custom_call.1} parent=1 // pred_fallthru
      _
    %230 = vsyncpa [#allocation4], 1

</llo_original>
